<compile_context>
chip_gen: v7x
topology: tpu7x:2x2x1
jax: 0.10.0
libtpu: 0.0.40
codegen_flags: <defaults>
</compile_context>

<pallas_src>
import math

import jax
import jax.numpy as jnp
import numpy as np
from jax import lax
from jax.experimental import pallas as pl
from jax.experimental.pallas import tpu as pltpu


# ----------------------------------------------------------------------------
# Fused Pallas kernel: layer1 + layer2 + final stack/max/min/mean
# ----------------------------------------------------------------------------
def fam_gat_fused_kernel(feat_ref, att_ref, src_oh_ref, dst_oh_ref,
                         exph_ref, expd_ref, w1_ref, b1_ref, w2_ref, b2_ref,
                         out_ref):
    # feat_ref: (N, B*Din)     att_ref: (E, B)
    # src_oh:   (E, N)         dst_oh:  (N, E)
    # exph:     (B, B*H)       expd:    (B, B*Dout)     (static 0/1 expanders)
    # w1:       (B*Din, B*H)   b1:      (1, B*H)        (block-diagonal / tiled)
    # w2:       (B*H, B*Dout)  b2:      (1, B*Dout)
    # out_ref:  (5, B*Dout)
    N = dst_oh_ref.shape[0]

    att = att_ref[...]                                                  # (E, B)
    src_oh = src_oh_ref[...]                                            # (E, N)
    dst_oh = dst_oh_ref[...]                                            # (N, E)

    # Expand per-edge attention across each batch's feature block (two small
    # independent matmuls; no lane slicing / relayout).
    att_h = jnp.dot(att, exph_ref[...],
                    preferred_element_type=jnp.float32)                 # (E, B*H)
    att_d = jnp.dot(att, expd_ref[...],
                    preferred_element_type=jnp.float32)                 # (E, B*Dout)

    # ---- Layer 1: project -> gather(src) -> attention -> scatter-sum(dst) ----
    z1 = jnp.dot(feat_ref[...], w1_ref[...],
                 preferred_element_type=jnp.float32) + b1_ref[...]      # (N, B*H)
    g1 = jnp.dot(src_oh, z1,
                 preferred_element_type=jnp.float32) * att_h            # (E, B*H)
    h1 = jnp.dot(dst_oh, g1,
                 preferred_element_type=jnp.float32)                    # (N, B*H)

    # ---- Layer 2 ----
    z2 = jnp.dot(h1, w2_ref[...],
                 preferred_element_type=jnp.float32) + b2_ref[...]      # (N, B*Dout)
    g2 = jnp.dot(src_oh, z2,
                 preferred_element_type=jnp.float32) * att_d            # (E, B*Dout)
    h2 = jnp.dot(dst_oh, g2,
                 preferred_element_type=jnp.float32)                    # (N, B*Dout)

    # ---- Final stack((x[0], x[1], max(x[2:]), min(x[2:]), mean(x[2:]))) over
    # the node (sublane) axis, via masked reductions with one (N,1) iota mask.
    node = lax.broadcasted_iota(jnp.int32, (N, 1), 0)                   # (N, 1)
    tail = node >= 2
    row0 = jnp.sum(jnp.where(node == 0, h2, 0.0), axis=0, keepdims=True)
    row1 = jnp.sum(jnp.where(node == 1, h2, 0.0), axis=0, keepdims=True)
    mx = jnp.max(jnp.where(tail, h2, -jnp.inf), axis=0, keepdims=True)
    mn = jnp.min(jnp.where(tail, h2, jnp.inf), axis=0, keepdims=True)
    mean = jnp.sum(jnp.where(tail, h2, 0.0), axis=0,
                   keepdims=True) / float(N - 2)

    # Single full-block, lane-dense 2-D store.
    out_ref[...] = jnp.concatenate([row0, row1, mx, mn, mean], axis=0)  # (5, B*Dout)


# ----------------------------------------------------------------------------
# Static constants (graph- / shape-dependent; computed ONCE, not per call)
# ----------------------------------------------------------------------------
def make_graph_constants(src, dst, n_nodes):
    src = np.asarray(src)
    dst = np.asarray(dst)
    E = src.shape[0]
    src_oh = np.zeros((E, n_nodes), np.float32)
    src_oh[np.arange(E), src] = 1.0                    # (E, N)
    dst_oh = np.zeros((n_nodes, E), np.float32)
    dst_oh[dst, np.arange(E)] = 1.0                    # (N, E)
    return jnp.asarray(src_oh), jnp.asarray(dst_oh)


def make_expansion_constants(batch, h_dim, out_dim):
    exp_h = np.zeros((batch, batch * h_dim), np.float32)
    exp_d = np.zeros((batch, batch * out_dim), np.float32)
    for b in range(batch):
        exp_h[b, b * h_dim:(b + 1) * h_dim] = 1.0
        exp_d[b, b * out_dim:(b + 1) * out_dim] = 1.0
    return jnp.asarray(exp_h), jnp.asarray(exp_d)


def prepare_params(params, batch):
    """Block-diagonal weights / tiled biases so B rides on the lane axis."""
    w1 = np.asarray(params["W1"], np.float32)
    w2 = np.asarray(params["W2"], np.float32)
    b1 = np.asarray(params["b1"], np.float32)
    b2 = np.asarray(params["b2"], np.float32)
    din, h = w1.shape
    _, dout = w2.shape
    w1bd = np.zeros((batch * din, batch * h), np.float32)
    w2bd = np.zeros((batch * h, batch * dout), np.float32)
    for b in range(batch):
        w1bd[b * din:(b + 1) * din, b * h:(b + 1) * h] = w1
        w2bd[b * h:(b + 1) * h, b * dout:(b + 1) * dout] = w2
    b1t = np.tile(b1, batch).reshape(1, batch * h)
    b2t = np.tile(b2, batch).reshape(1, batch * dout)
    return (jnp.asarray(w1bd), jnp.asarray(b1t),
            jnp.asarray(w2bd), jnp.asarray(b2t))


# ----------------------------------------------------------------------------
# Wrapper (per-call path: only free reshapes + one pallas_call)
# ----------------------------------------------------------------------------
def fam_gat_forward(feat_nbd, attention, consts):
    """feat_nbd: [N, B, Din], attention: [E, B, 1] -> [5, B, Dout]."""
    N, B, Din = feat_nbd.shape
    E = attention.shape[0]
    src_oh, dst_oh, exp_h, exp_d, w1bd, b1t, w2bd, b2t = consts
    BH = w1bd.shape[1]
    BD = w2bd.shape[1]
    Dout = BD // B
    assert N > 2, "final max/min/mean over nodes 2.. requires N > 2"

    feat2d = feat_nbd.reshape(N, B * Din)              # free reshape (no transpose)
    att = attention.reshape(E, B)                      # free reshape (squeeze)

    vmem = pl.BlockSpec(memory_space=pltpu.MemorySpace.VMEM)
    out2d = pl.pallas_call(
        fam_gat_fused_kernel,
        out_shape=jax.ShapeDtypeStruct((5, BD), jnp.float32),
        in_specs=[vmem] * 10,
        out_specs=vmem,
    )(feat2d, att, src_oh, dst_oh, exp_h, exp_d, w1bd, b1t, w2bd, b2t)

    return out2d.reshape(5, B, Dout)


# ----------------------------------------------------------------------------
# Pure-JAX reference (edge-list message passing, matches DGL semantics)
# ----------------------------------------------------------------------------
def gat_layer_ref(feat_nbd, W, b, src, dst, attention):
    N = feat_nbd.shape[0]
    z = jnp.einsum("nbi,io->nbo", feat_nbd, W) + b              # [N, B, Dout]
    m = z[src] * attention                                      # [E, B, Dout]
    return jnp.zeros((N,) + z.shape[1:], jnp.float32).at[dst].add(m)


def fam_gat_ref(feat_nbd, attention, src, dst, params):
    x = gat_layer_ref(feat_nbd, params["W1"], params["b1"], src, dst, attention)
    x = gat_layer_ref(x, params["W2"], params["b2"], src, dst, attention)
    return jnp.stack(
        (x[0], x[1],
         jnp.max(x[2:], axis=0), jnp.min(x[2:], axis=0), jnp.mean(x[2:], axis=0)),
        axis=0)


# ----------------------------------------------------------------------------
# Deterministic parameter init (matches nn.Module __init__ recipe)
# ----------------------------------------------------------------------------
def xavier_uniform(key, fan_in, fan_out, gain):
    limit = gain * math.sqrt(6.0 / (fan_in + fan_out))
    return jax.random.uniform(key, (fan_in, fan_out), jnp.float32, -limit, limit)


if __name__ == "__main__":
    N_NODES, BATCH = 8, 2
    INPUT_DIM, H_DIM, OUT_DIM = 16, 32, 16

    key = jax.random.PRNGKey(0)
    k_feat, k_att, k_w1, k_w2 = jax.random.split(key, 4)

    # Deterministic fully-connected edge list (no self loops), DGL-style.
    src_l, dst_l = [], []
    for u in range(N_NODES):
        for v in range(N_NODES):
            if u != v:
                src_l.append(u)
                dst_l.append(v)
    src = jnp.array(src_l, jnp.int32)
    dst = jnp.array(dst_l, jnp.int32)
    E = src.shape[0]

    feat = jax.random.normal(k_feat, (N_NODES, BATCH, INPUT_DIM), jnp.float32)
    # TODO(synk): stands in for TSFuzzyLayer(g, feat, etypes) output.
    attention = jax.nn.sigmoid(
        jax.random.normal(k_att, (E, BATCH, 1), jnp.float32))

    gain = math.sqrt(2.0)  # nn.init.calculate_gain('relu')
    params = {
        "W1": xavier_uniform(k_w1, INPUT_DIM, H_DIM, gain),
        "b1": jnp.zeros((H_DIM,), jnp.float32),
        "W2": xavier_uniform(k_w2, H_DIM, OUT_DIM, gain),
        "b2": jnp.zeros((OUT_DIM,), jnp.float32),
    }

    # Hoisted, computed once (fixed edge list / parameter transform).
    src_oh, dst_oh = make_graph_constants(src_l, dst_l, N_NODES)
    exp_h, exp_d = make_expansion_constants(BATCH, H_DIM, OUT_DIM)
    w1bd, b1t, w2bd, b2t = prepare_params(params, BATCH)
    consts = (src_oh, dst_oh, exp_h, exp_d, w1bd, b1t, w2bd, b2t)

    out = fam_gat_forward(feat, attention, consts)
    out = jax.block_until_ready(out)

    ref = jax.block_until_ready(fam_gat_ref(feat, attention, src, dst, params))
    assert out.shape == (5, BATCH, OUT_DIM), out.shape
    np.testing.assert_allclose(np.asarray(out), np.asarray(ref),
                               rtol=1e-4, atol=1e-4)
    print("KERNEL_OK")
</pallas_src>

<mosaic_0001>
module attributes {stable_mosaic.version = 11 : i64} {
  func.func @fam_gat_fused_kernel(%arg0: memref<8x32xf32, #tpu.memory_space<vmem>>, %arg1: memref<56x2xf32, #tpu.memory_space<vmem>>, %arg2: memref<56x8xf32, #tpu.memory_space<vmem>>, %arg3: memref<8x56xf32, #tpu.memory_space<vmem>>, %arg4: memref<2x64xf32, #tpu.memory_space<vmem>>, %arg5: memref<2x32xf32, #tpu.memory_space<vmem>>, %arg6: memref<32x64xf32, #tpu.memory_space<vmem>>, %arg7: memref<1x64xf32, #tpu.memory_space<vmem>>, %arg8: memref<64x32xf32, #tpu.memory_space<vmem>>, %arg9: memref<1x32xf32, #tpu.memory_space<vmem>>, %arg10: memref<5x32xf32, #tpu.memory_space<vmem>>) attributes {dimension_semantics = [], scalar_prefetch = 0 : i64, scratch_operands = 0 : i64, tpu.core_type = #tpu.core_type<tc>} {
    %c0 = arith.constant 0 : index
    %c0_0 = arith.constant 0 : index
    %0 = vector.load %arg1[%c0, %c0_0] : memref<56x2xf32, #tpu.memory_space<vmem>>, vector<56x2xf32>
    %c0_1 = arith.constant 0 : index
    %c0_2 = arith.constant 0 : index
    %1 = vector.load %arg2[%c0_1, %c0_2] : memref<56x8xf32, #tpu.memory_space<vmem>>, vector<56x8xf32>
    %c0_3 = arith.constant 0 : index
    %c0_4 = arith.constant 0 : index
    %2 = vector.load %arg3[%c0_3, %c0_4] : memref<8x56xf32, #tpu.memory_space<vmem>>, vector<8x56xf32>
    %c0_5 = arith.constant 0 : index
    %c0_6 = arith.constant 0 : index
    %3 = vector.load %arg4[%c0_5, %c0_6] : memref<2x64xf32, #tpu.memory_space<vmem>>, vector<2x64xf32>
    %cst = arith.constant dense<0.000000e+00> : vector<56x64xf32>
    %4 = tpu.matmul %0, %3, %cst {dimension_numbers = #tpu.dot_dimension_numbers<[1], [0], [0], [1], [0, 0, 1, 1], [], []>} : vector<56x2xf32>, vector<2x64xf32>, vector<56x64xf32> -> vector<56x64xf32>
    %c0_7 = arith.constant 0 : index
    %c0_8 = arith.constant 0 : index
    %5 = vector.load %arg5[%c0_7, %c0_8] : memref<2x32xf32, #tpu.memory_space<vmem>>, vector<2x32xf32>
    %cst_9 = arith.constant dense<0.000000e+00> : vector<56x32xf32>
    %6 = tpu.matmul %0, %5, %cst_9 {dimension_numbers = #tpu.dot_dimension_numbers<[1], [0], [0], [1], [0, 0, 1, 1], [], []>} : vector<56x2xf32>, vector<2x32xf32>, vector<56x32xf32> -> vector<56x32xf32>
    %c0_10 = arith.constant 0 : index
    %c0_11 = arith.constant 0 : index
    %7 = vector.load %arg0[%c0_10, %c0_11] : memref<8x32xf32, #tpu.memory_space<vmem>>, vector<8x32xf32>
    %c0_12 = arith.constant 0 : index
    %c0_13 = arith.constant 0 : index
    %8 = vector.load %arg6[%c0_12, %c0_13] : memref<32x64xf32, #tpu.memory_space<vmem>>, vector<32x64xf32>
    %cst_14 = arith.constant dense<0.000000e+00> : vector<8x64xf32>
    %9 = tpu.matmul %7, %8, %cst_14 {dimension_numbers = #tpu.dot_dimension_numbers<[1], [0], [0], [1], [0, 0, 1, 1], [], []>} : vector<8x32xf32>, vector<32x64xf32>, vector<8x64xf32> -> vector<8x64xf32>
    %c0_15 = arith.constant 0 : index
    %c0_16 = arith.constant 0 : index
    %10 = vector.load %arg7[%c0_15, %c0_16] : memref<1x64xf32, #tpu.memory_space<vmem>>, vector<1x64xf32>
    %11 = vector.broadcast %10 : vector<1x64xf32> to vector<8x64xf32>
    %12 = arith.addf %9, %11 : vector<8x64xf32>
    %cst_17 = arith.constant dense<0.000000e+00> : vector<56x64xf32>
    %13 = tpu.matmul %1, %12, %cst_17 {dimension_numbers = #tpu.dot_dimension_numbers<[1], [0], [0], [1], [0, 0, 1, 1], [], []>} : vector<56x8xf32>, vector<8x64xf32>, vector<56x64xf32> -> vector<56x64xf32>
    %14 = arith.mulf %13, %4 : vector<56x64xf32>
    %cst_18 = arith.constant dense<0.000000e+00> : vector<8x64xf32>
    %15 = tpu.matmul %2, %14, %cst_18 {dimension_numbers = #tpu.dot_dimension_numbers<[1], [0], [0], [1], [0, 0, 1, 1], [], []>} : vector<8x56xf32>, vector<56x64xf32>, vector<8x64xf32> -> vector<8x64xf32>
    %c0_19 = arith.constant 0 : index
    %c0_20 = arith.constant 0 : index
    %16 = vector.load %arg8[%c0_19, %c0_20] : memref<64x32xf32, #tpu.memory_space<vmem>>, vector<64x32xf32>
    %cst_21 = arith.constant dense<0.000000e+00> : vector<8x32xf32>
    %17 = tpu.matmul %15, %16, %cst_21 {dimension_numbers = #tpu.dot_dimension_numbers<[1], [0], [0], [1], [0, 0, 1, 1], [], []>} : vector<8x64xf32>, vector<64x32xf32>, vector<8x32xf32> -> vector<8x32xf32>
    %c0_22 = arith.constant 0 : index
    %c0_23 = arith.constant 0 : index
    %18 = vector.load %arg9[%c0_22, %c0_23] : memref<1x32xf32, #tpu.memory_space<vmem>>, vector<1x32xf32>
    %19 = vector.broadcast %18 : vector<1x32xf32> to vector<8x32xf32>
    %20 = arith.addf %17, %19 : vector<8x32xf32>
    %cst_24 = arith.constant dense<0.000000e+00> : vector<56x32xf32>
    %21 = tpu.matmul %1, %20, %cst_24 {dimension_numbers = #tpu.dot_dimension_numbers<[1], [0], [0], [1], [0, 0, 1, 1], [], []>} : vector<56x8xf32>, vector<8x32xf32>, vector<56x32xf32> -> vector<56x32xf32>
    %22 = arith.mulf %21, %6 : vector<56x32xf32>
    %cst_25 = arith.constant dense<0.000000e+00> : vector<8x32xf32>
    %23 = tpu.matmul %2, %22, %cst_25 {dimension_numbers = #tpu.dot_dimension_numbers<[1], [0], [0], [1], [0, 0, 1, 1], [], []>} : vector<8x56xf32>, vector<56x32xf32>, vector<8x32xf32> -> vector<8x32xf32>
    %24 = tpu.iota {dimensions = array<i32: 0>} : vector<8x1xi32>
    %c2_i32 = arith.constant 2 : i32
    %25 = vector.broadcast %c2_i32 : i32 to vector<8x1xi32>
    %26 = arith.cmpi sge, %24, %25 : vector<8x1xi32>
    %c0_i32 = arith.constant 0 : i32
    %27 = vector.broadcast %c0_i32 : i32 to vector<8x1xi32>
    %28 = arith.cmpi eq, %24, %27 : vector<8x1xi32>
    %cst_26 = arith.constant 0.000000e+00 : f32
    %29 = vector.shape_cast %28 : vector<8x1xi1> to vector<8x1xi1>
    %30 = vector.broadcast %29 : vector<8x1xi1> to vector<8x32xi1>
    %31 = vector.broadcast %cst_26 : f32 to vector<8x32xf32>
    %32 = arith.select %30, %23, %31 : vector<8x32xi1>, vector<8x32xf32>
    %cst_27 = arith.constant dense<0.000000e+00> : vector<32xf32>
    %33 = vector.multi_reduction <add>, %32, %cst_27 [0] : vector<8x32xf32> to vector<32xf32>
    %34 = vector.shape_cast %33 : vector<32xf32> to vector<1x32xf32>
    %c1_i32 = arith.constant 1 : i32
    %35 = vector.broadcast %c1_i32 : i32 to vector<8x1xi32>
    %36 = arith.cmpi eq, %24, %35 : vector<8x1xi32>
    %cst_28 = arith.constant 0.000000e+00 : f32
    %37 = vector.shape_cast %36 : vector<8x1xi1> to vector<8x1xi1>
    %38 = vector.broadcast %37 : vector<8x1xi1> to vector<8x32xi1>
    %39 = vector.broadcast %cst_28 : f32 to vector<8x32xf32>
    %40 = arith.select %38, %23, %39 : vector<8x32xi1>, vector<8x32xf32>
    %cst_29 = arith.constant dense<0.000000e+00> : vector<32xf32>
    %41 = vector.multi_reduction <add>, %40, %cst_29 [0] : vector<8x32xf32> to vector<32xf32>
    %42 = vector.shape_cast %41 : vector<32xf32> to vector<1x32xf32>
    %cst_30 = arith.constant 0xFF800000 : f32
    %43 = vector.shape_cast %26 : vector<8x1xi1> to vector<8x1xi1>
    %44 = vector.broadcast %43 : vector<8x1xi1> to vector<8x32xi1>
    %45 = vector.broadcast %cst_30 : f32 to vector<8x32xf32>
    %46 = arith.select %44, %23, %45 : vector<8x32xi1>, vector<8x32xf32>
    %cst_31 = arith.constant dense<0xFF800000> : vector<32xf32>
    %47 = vector.multi_reduction <maximumf>, %46, %cst_31 [0] : vector<8x32xf32> to vector<32xf32>
    %48 = vector.shape_cast %47 : vector<32xf32> to vector<1x32xf32>
    %cst_32 = arith.constant 0x7F800000 : f32
    %49 = vector.shape_cast %26 : vector<8x1xi1> to vector<8x1xi1>
    %50 = vector.broadcast %49 : vector<8x1xi1> to vector<8x32xi1>
    %51 = vector.broadcast %cst_32 : f32 to vector<8x32xf32>
    %52 = arith.select %50, %23, %51 : vector<8x32xi1>, vector<8x32xf32>
    %cst_33 = arith.constant dense<0x7F800000> : vector<32xf32>
    %53 = vector.multi_reduction <minimumf>, %52, %cst_33 [0] : vector<8x32xf32> to vector<32xf32>
    %54 = vector.shape_cast %53 : vector<32xf32> to vector<1x32xf32>
    %cst_34 = arith.constant 0.000000e+00 : f32
    %55 = vector.shape_cast %26 : vector<8x1xi1> to vector<8x1xi1>
    %56 = vector.broadcast %55 : vector<8x1xi1> to vector<8x32xi1>
    %57 = vector.broadcast %cst_34 : f32 to vector<8x32xf32>
    %58 = arith.select %56, %23, %57 : vector<8x32xi1>, vector<8x32xf32>
    %cst_35 = arith.constant dense<0.000000e+00> : vector<32xf32>
    %59 = vector.multi_reduction <add>, %58, %cst_35 [0] : vector<8x32xf32> to vector<32xf32>
    %60 = vector.shape_cast %59 : vector<32xf32> to vector<1x32xf32>
    %cst_36 = arith.constant 6.000000e+00 : f32
    %61 = vector.broadcast %cst_36 : f32 to vector<1x32xf32>
    %62 = arith.divf %60, %61 : vector<1x32xf32>
    %63 = tpu.concatenate %34, %42, %48, %54, %62 in 0 : vector<1x32xf32>, vector<1x32xf32>, vector<1x32xf32>, vector<1x32xf32>, vector<1x32xf32> -> vector<5x32xf32>
    %c0_37 = arith.constant 0 : index
    %c0_38 = arith.constant 0 : index
    %64 = vector.load %arg10[%c0_37, %c0_38] : memref<5x32xf32, #tpu.memory_space<vmem>>, vector<5x32xf32>
    tpu.vector_store %arg10[%c0_37, %c0_38], %63 {strides = array<i32>} : memref<5x32xf32, #tpu.memory_space<vmem>>, vector<5x32xf32>,
    return
  }
}

</mosaic_0001>

<llo_original>
// kernel: tpu_custom_call.1
$region0: #{tpu_custom_call.1}
  #allocation0 [shape = 'u32[]', space=smem, size = 0x4, offset = 0x4, fixed_abs, tag = 'smem constant byte address 0x4 - core index']
  #allocation1 [shape = 'u32[144,128]{1,0:T(1,128)}', space=vmem, size = 0x12000, scoped, tag = 'internal scratch']
  %s0 = inlined_call_operand.vmem [shape: f32[8,32], index: 0, kind: input, shape index: {}]
  %s1 = inlined_call_operand.vmem [shape: f32[56,2], index: 1, kind: input, shape index: {}]
  %s2 = inlined_call_operand.vmem [shape: f32[56,8], index: 2, kind: input, shape index: {}]
  %s3 = inlined_call_operand.vmem [shape: f32[8,56], index: 3, kind: input, shape index: {}]
  %s4 = inlined_call_operand.vmem [shape: f32[2,64], index: 4, kind: input, shape index: {}]
  %s5 = inlined_call_operand.vmem [shape: f32[2,32], index: 5, kind: input, shape index: {}]
  %s6 = inlined_call_operand.vmem [shape: f32[32,64], index: 6, kind: input, shape index: {}]
  %s7 = inlined_call_operand.vmem [shape: f32[1,64], index: 7, kind: input, shape index: {}]
  %s8 = inlined_call_operand.vmem [shape: f32[64,32], index: 8, kind: input, shape index: {}]
  %s9 = inlined_call_operand.vmem [shape: f32[1,32], index: 9, kind: input, shape index: {}]
  %s10 = inlined_call_operand.hbm [shape: f32[5,32], index: 10, kind: output, shape index: {}]
  %s11 = sld [smem:[#allocation0]]
  $region50: #{tpu_custom_call.1} parent=0
    _
  %s13 = ssub.s32 1, %s11
  %s14 = scalar_select 0, %s13, %s11
  $region1: #{tpu_custom_call.1} parent=0
    #allocation2 [shape = 'u8[4096]{0}', space=vmem, size = 0x1000, scoped, tag = 'output window, operand 0, single buffered']
    #allocation3 [shape = 's32[1]{0}', space=sflag, size = 0x4, scoped, tag = 'scoped memory for tpu_custom_call.1']
    %15 = vsyncpa [#allocation3], 0
    // Predicated region
    $region2: #{tpu_custom_call.1} parent=1 // pred_check
      _
    $region3: #{tpu_custom_call.1} parent=1 // pred_check_branch
      %17 = sbr.rel (0) target = $region5
    $region4: #{tpu_custom_call.1} parent=1 // pred_region
      _
    $region5: #{tpu_custom_call.1} parent=1 // pred_fallthru
      _
    // Predicated region
    $region6: #{tpu_custom_call.1} parent=1 // pred_check
      _
    $region7: #{tpu_custom_call.1} parent=1 // pred_check_branch
      %19 = sbr.rel (0) target = $region9
    $region8: #{tpu_custom_call.1} parent=1 // pred_region
      _
    $region9: #{tpu_custom_call.1} parent=1 // pred_fallthru
      _
    // Predicated region
    $region10: #{tpu_custom_call.1} parent=1 // pred_check
      _
    $region11: #{tpu_custom_call.1} parent=1 // pred_check_branch
      %21 = sbr.rel (0) target = $region13
    $region12: #{tpu_custom_call.1} parent=1 // pred_region
      _
    $region13: #{tpu_custom_call.1} parent=1 // pred_fallthru
      _
    // Predicated region
    $region14: #{tpu_custom_call.1} parent=1 // pred_check
      _
    $region15: #{tpu_custom_call.1} parent=1 // pred_check_branch
      %23 = sbr.rel (0) target = $region17
    $region16: #{tpu_custom_call.1} parent=1 // pred_region
      _
    $region17: #{tpu_custom_call.1} parent=1 // pred_fallthru
      _
    // Predicated region
    $region18: #{tpu_custom_call.1} parent=1 // pred_check
      _
    $region19: #{tpu_custom_call.1} parent=1 // pred_check_branch
      %25 = sbr.rel (0) target = $region21
    $region20: #{tpu_custom_call.1} parent=1 // pred_region
      _
    $region21: #{tpu_custom_call.1} parent=1 // pred_fallthru
      _
    // Predicated region
    $region22: #{tpu_custom_call.1} parent=1 // pred_check
      _
    $region23: #{tpu_custom_call.1} parent=1 // pred_check_branch
      %27 = sbr.rel (0) target = $region25
    $region24: #{tpu_custom_call.1} parent=1 // pred_region
      _
    $region25: #{tpu_custom_call.1} parent=1 // pred_fallthru
      _
    // Predicated region
    $region26: #{tpu_custom_call.1} parent=1 // pred_check
      _
    $region27: #{tpu_custom_call.1} parent=1 // pred_check_branch
      %29 = sbr.rel (0) target = $region29
    $region28: #{tpu_custom_call.1} parent=1 // pred_region
      _
    $region29: #{tpu_custom_call.1} parent=1 // pred_fallthru
      _
    // Predicated region
    $region30: #{tpu_custom_call.1} parent=1 // pred_check
      _
    $region31: #{tpu_custom_call.1} parent=1 // pred_check_branch
      %31 = sbr.rel (0) target = $region33
    $region32: #{tpu_custom_call.1} parent=1 // pred_region
      _
    $region33: #{tpu_custom_call.1} parent=1 // pred_fallthru
      _
    // Predicated region
    $region34: #{tpu_custom_call.1} parent=1 // pred_check
      _
    $region35: #{tpu_custom_call.1} parent=1 // pred_check_branch
      %33 = sbr.rel (0) target = $region37
    $region36: #{tpu_custom_call.1} parent=1 // pred_region
      _
    $region37: #{tpu_custom_call.1} parent=1 // pred_fallthru
      _
    // Predicated region
    $region38: #{tpu_custom_call.1} parent=1 // pred_check
      _
    $region39: #{tpu_custom_call.1} parent=1 // pred_check_branch
      %35 = sbr.rel (0) target = $region41
    $region40: #{tpu_custom_call.1} parent=1 // pred_region
      _
    $region41: #{tpu_custom_call.1} parent=1 // pred_fallthru
      _
    %v36 = vld [vmem:[%s1] sm:$0xff]
    %v37 = vld [vmem:[%s1 + $0x8] sm:$0xff]
    %v38 = vld [vmem:[%s1 + $0x10] sm:$0xff]
    %v39 = vld [vmem:[%s1 + $0x18] sm:$0xff]
    %v40 = vld [vmem:[%s1 + $0x20] sm:$0xff]
    %v41 = vld [vmem:[%s1 + $0x28] sm:$0xff]
    %v42 = vld [vmem:[%s1 + $0x30] sm:$0xff]
    %v43 = vld [vmem:[%s2] sm:$0xff]
    %v44 = vld [vmem:[%s2 + $0x8] sm:$0xff]
    %v45 = vld [vmem:[%s2 + $0x10] sm:$0xff]
    %v46 = vld [vmem:[%s2 + $0x18] sm:$0xff]
    %v47 = vld [vmem:[%s2 + $0x20] sm:$0xff]
    %v48 = vld [vmem:[%s2 + $0x28] sm:$0xff]
    %v49 = vld [vmem:[%s2 + $0x30] sm:$0xff]
    %v50 = vld [vmem:[%s3] sm:$0xff]
    %v51 = vld [vmem:[%s4] sm:$0x3]
    %vm52 = vcmask 15360
    %v54 = vsel %vm52, %v36, 0
    %v57 = vsel %vm52, %v37, 0
    %v60 = vsel %vm52, %v38, 0
    %v63 = vsel %vm52, %v39, 0
    %v66 = vsel %vm52, %v40, 0
    %v69 = vsel %vm52, %v41, 0
    %v72 = vsel %vm52, %v42, 0
    %vm74 = vcmask 1041408
    %v76 = vsel %vm74, %v51, 0
    %78 = vmatprep.subr.mxu0 0.0
    %79 = vmatpush1.msra.mxu0 %v76
    %80 = vmatprep.subr.mxu0 0.0
    %81 = vmatpush1.msra.mxu0 0.0
    %82 = vmatprep.subr.mxu0 0.0
    %83 = vmatpush1.msra.mxu0 0.0
    %84 = vmatprep.subr.mxu0 0.0
    %85 = vmatpush1.msra.mxu0 0.0
    %86 = vmatprep.subr.mxu0 0.0
    %87 = vmatpush1.msra.mxu0 0.0
    %88 = vmatprep.subr.mxu0 0.0
    %89 = vmatpush1.msra.mxu0 0.0
    %90 = vmatprep.subr.mxu0 0.0
    %91 = vmatpush1.msra.mxu0 0.0
    %92 = vmatprep.subr.mxu0 0.0
    %93 = vmatpush1.msra.mxu0 0.0
    %94 = vmatprep.subr.mxu0 0.0
    %95 = vmatpush1.msra.mxu0 0.0
    %96 = vmatprep.subr.mxu0 0.0
    %97 = vmatpush1.msra.mxu0 0.0
    %98 = vmatprep.subr.mxu0 0.0
    %99 = vmatpush1.msra.mxu0 0.0
    %100 = vmatprep.subr.mxu0 0.0
    %101 = vmatpush1.msra.mxu0 0.0
    %102 = vmatprep.subr.mxu0 0.0
    %103 = vmatpush1.msra.mxu0 0.0
    %104 = vmatprep.subr.mxu0 0.0
    %105 = vmatpush1.msra.mxu0 0.0
    %106 = vmatprep.subr.mxu0 0.0
    %107 = vmatpush1.msra.mxu0 0.0
    %108 = vmatprep.subr.mxu0 0.0
    %109 = vmatpush1.msra.mxu0 0.0
    %110 = vmatprep.subr.mxu0 0.0
    %111 = vmatpush1.msra.mxu0 0.0
    %112 = vmatprep.subr.mxu0 0.0
    %113 = vmatpush1.msra.mxu0 0.0
    %114 = vmatprep.subr.mxu0 0.0
    %115 = vmatpush1.msra.mxu0 0.0
    %116 = vmatprep.subr.mxu0 0.0
    %117 = vmatpush1.msra.mxu0 0.0
    %118 = vmatprep.subr.mxu0 0.0
    %119 = vmatpush1.msra.mxu0 0.0
    %120 = vmatprep.subr.mxu0 0.0
    %121 = vmatpush1.msra.mxu0 0.0
    %122 = vmatprep.subr.mxu0 0.0
    %123 = vmatpush1.msra.mxu0 0.0
    %124 = vmatprep.subr.mxu0 0.0
    %125 = vmatpush1.msra.mxu0 0.0
    %126 = vmatprep.subr.mxu0 0.0
    %127 = vmatpush1.msra.mxu0 0.0
    %128 = vmatprep.subr.mxu0 0.0
    %129 = vmatpush1.msra.mxu0 0.0
    %130 = vmatprep.subr.mxu0 0.0
    %131 = vmatpush1.msra.mxu0 0.0
    %132 = vmatprep.subr.mxu0 0.0
    %133 = vmatpush1.msra.mxu0 0.0
    %134 = vmatprep.subr.mxu0 0.0
    %135 = vmatpush1.msra.mxu0 0.0
    %136 = vmatprep.subr.mxu0 0.0
    %137 = vmatpush1.msra.mxu0 0.0
    %138 = vmatprep.subr.mxu0 0.0
    %139 = vmatpush1.msra.mxu0 0.0
    %140 = vmatprep.subr.mxu0 0.0
    %141 = vmatpush1.msra.mxu0 0.0
    %142 = vmatprep.mubr.f32.mxu0 0.0
    %143 = vmatmul.mubr.f32.gmra.mrb[0].mxu0 %v54
    %v144 = vpop.f32.mrb[0].mxu0
    %v145 = vadd.f32 0.0, %v144
    %v146 = vpop.f32.mrb[0].mxu0
    %147 = vmatprep.mubr.f32.mxu0 0.0
    %148 = vmatmul.mubr.f32.gmra.mrb[0].mxu0 %v57
    %v149 = vpop.f32.mrb[0].mxu0
    %v150 = vadd.f32 0.0, %v149
    %v151 = vpop.f32.mrb[0].mxu0
    %152 = vmatprep.mubr.f32.mxu0 0.0
    %153 = vmatmul.mubr.f32.gmra.mrb[0].mxu0 %v60
    %v154 = vpop.f32.mrb[0].mxu0
    %v155 = vadd.f32 0.0, %v154
    %v156 = vpop.f32.mrb[0].mxu0
    %157 = vmatprep.mubr.f32.mxu0 0.0
    %158 = vmatmul.mubr.f32.gmra.mrb[0].mxu0 %v63
    %v159 = vpop.f32.mrb[0].mxu0
    %v160 = vadd.f32 0.0, %v159
    %v161 = vpop.f32.mrb[0].mxu0
    %162 = vmatprep.mubr.f32.mxu0 0.0
    %163 = vmatmul.mubr.f32.gmra.mrb[0].mxu0 %v66
    %v164 = vpop.f32.mrb[0].mxu0
    %v165 = vadd.f32 0.0, %v164
    %v166 = vpop.f32.mrb[0].mxu0
    %167 = vmatprep.mubr.f32.mxu0 0.0
    %168 = vmatmul.mubr.f32.gmra.mrb[0].mxu0 %v69
    %v169 = vpop.f32.mrb[0].mxu0
    %v170 = vadd.f32 0.0, %v169
    %v171 = vpop.f32.mrb[0].mxu0
    %172 = vmatprep.mubr.f32.mxu0 0.0
    %173 = vmatmul.mubr.f32.gmra.mrb[0].mxu0 %v72
    %v174 = vpop.f32.mrb[0].mxu0
    %v175 = vadd.f32 0.0, %v174
    %v176 = vpop.f32.mrb[0].mxu0
    %177 = vdwg.mxu0
    %v178 = vld [vmem:[%s5] sm:$0x3]
    %v180 = vsel %vm74, %v178, 0
    %182 = vmatprep.subr.mxu0 0.0
    %183 = vmatpush1.msra.mxu0 %v180
    %184 = vmatprep.subr.mxu0 0.0
    %185 = vmatpush1.msra.mxu0 0.0
    %186 = vmatprep.subr.mxu0 0.0
    %187 = vmatpush1.msra.mxu0 0.0
    %188 = vmatprep.subr.mxu0 0.0
    %189 = vmatpush1.msra.mxu0 0.0
    %190 = vmatprep.subr.mxu0 0.0
    %191 = vmatpush1.msra.mxu0 0.0
    %192 = vmatprep.subr.mxu0 0.0
    %193 = vmatpush1.msra.mxu0 0.0
    %194 = vmatprep.subr.mxu0 0.0
    %195 = vmatpush1.msra.mxu0 0.0
    %196 = vmatprep.subr.mxu0 0.0
    %197 = vmatpush1.msra.mxu0 0.0
    %198 = vmatprep.subr.mxu0 0.0
    %199 = vmatpush1.msra.mxu0 0.0
    %200 = vmatprep.subr.mxu0 0.0
    %201 = vmatpush1.msra.mxu0 0.0
    %202 = vmatprep.subr.mxu0 0.0
    %203 = vmatpush1.msra.mxu0 0.0
    %204 = vmatprep.subr.mxu0 0.0
    %205 = vmatpush1.msra.mxu0 0.0
    %206 = vmatprep.subr.mxu0 0.0
    %207 = vmatpush1.msra.mxu0 0.0
    %208 = vmatprep.subr.mxu0 0.0
    %209 = vmatpush1.msra.mxu0 0.0
    %210 = vmatprep.subr.mxu0 0.0
    %211 = vmatpush1.msra.mxu0 0.0
    %212 = vmatprep.subr.mxu0 0.0
    %213 = vmatpush1.msra.mxu0 0.0
    %214 = vmatprep.subr.mxu0 0.0
    %215 = vmatpush1.msra.mxu0 0.0
    %216 = vmatprep.subr.mxu0 0.0
    %217 = vmatpush1.msra.mxu0 0.0
    %218 = vmatprep.subr.mxu0 0.0
    %219 = vmatpush1.msra.mxu0 0.0
    %220 = vmatprep.subr.mxu0 0.0
    %221 = vmatpush1.msra.mxu0 0.0
    %222 = vmatprep.subr.mxu0 0.0
    %223 = vmatpush1.msra.mxu0 0.0
    %224 = vmatprep.subr.mxu0 0.0
    %225 = vmatpush1.msra.mxu0 0.0
    %226 = vmatprep.subr.mxu0 0.0
    %227 = vmatpush1.msra.mxu0 0.0
    %228 = vmatprep.subr.mxu0 0.0
    %229 = vmatpush1.msra.mxu0 0.0
    %230 = vmatprep.subr.mxu0 0.0
    %231 = vmatpush1.msra.mxu0 0.0
    %232 = vmatprep.subr.mxu0 0.0
    %233 = vmatpush1.msra.mxu0 0.0
    %234 = vmatprep.subr.mxu0 0.0
    %235 = vmatpush1.msra.mxu0 0.0
    %236 = vmatprep.subr.mxu0 0.0
    %237 = vmatpush1.msra.mxu0 0.0
    %238 = vmatprep.subr.mxu0 0.0
    %239 = vmatpush1.msra.mxu0 0.0
    %240 = vmatprep.subr.mxu0 0.0
    %241 = vmatpush1.msra.mxu0 0.0
    %242 = vmatprep.subr.mxu0 0.0
    %243 = vmatpush1.msra.mxu0 0.0
    %244 = vmatprep.subr.mxu0 0.0
    %245 = vmatpush1.msra.mxu0 0.0
    %246 = vmatprep.mubr.f32.mxu0 0.0
    %247 = vmatmul.mubr.f32.gmra.mrb[0].mxu0 %v54
    %v248 = vpop.f32.mrb[0].mxu0
    %v249 = vadd.f32 0.0, %v248
    %v250 = vpop.f32.mrb[0].mxu0
    %251 = vmatprep.mubr.f32.mxu0 0.0
    %252 = vmatmul.mubr.f32.gmra.mrb[0].mxu0 %v57
    %v253 = vpop.f32.mrb[0].mxu0
    %v254 = vadd.f32 0.0, %v253
    %v255 = vpop.f32.mrb[0].mxu0
    %256 = vmatprep.mubr.f32.mxu0 0.0
    %257 = vmatmul.mubr.f32.gmra.mrb[0].mxu0 %v60
    %v258 = vpop.f32.mrb[0].mxu0
    %v259 = vadd.f32 0.0, %v258
    %v260 = vpop.f32.mrb[0].mxu0
    %261 = vmatprep.mubr.f32.mxu0 0.0
    %262 = vmatmul.mubr.f32.gmra.mrb[0].mxu0 %v63
    %v263 = vpop.f32.mrb[0].mxu0
    %v264 = vadd.f32 0.0, %v263
    %v265 = vpop.f32.mrb[0].mxu0
    %266 = vmatprep.mubr.f32.mxu0 0.0
    %267 = vmatmul.mubr.f32.gmra.mrb[0].mxu0 %v66
    %v268 = vpop.f32.mrb[0].mxu0
    %v269 = vadd.f32 0.0, %v268
    %v270 = vpop.f32.mrb[0].mxu0
    %271 = vmatprep.mubr.f32.mxu0 0.0
    %272 = vmatmul.mubr.f32.gmra.mrb[0].mxu0 %v69
    %v273 = vpop.f32.mrb[0].mxu0
    %v274 = vadd.f32 0.0, %v273
    %v275 = vpop.f32.mrb[0].mxu0
    %276 = vmatprep.mubr.f32.mxu0 0.0
    %277 = vmatmul.mubr.f32.gmra.mrb[0].mxu0 %v72
    %v278 = vpop.f32.mrb[0].mxu0
    %v279 = vadd.f32 0.0, %v278
    %v280 = vpop.f32.mrb[0].mxu0
    %281 = vdwg.mxu0
    %v282 = vld [vmem:[%s0] sm:$0xff]
    %v283 = vld [vmem:[%s6] sm:$0xff]
    %v284 = vld [vmem:[%s6 + $0x8] sm:$0xff]
    %v285 = vld [vmem:[%s6 + $0x10] sm:$0xff]
    %v286 = vld [vmem:[%s6 + $0x18] sm:$0xff]
    %v287 = vld [vmem:[%s7] sm:$0x1]
    %v289 = vlaneseq
    %v290 = vshrl.u32 %v289, 7
    %v291 = vsub.s32 0, %v290
    %v292 = vrot.slane %v287, %v291
    %vm294 = vcmask 261120
    %v296 = vsel %vm294, %v282, 0
    %298 = vmatprep.subr.mxu0 0.0
    %299 = vmatpush1.msra.mxu0 %v283
    %300 = vmatprep.subr.mxu0 0.0
    %301 = vmatpush1.msra.mxu0 %v284
    %302 = vmatprep.subr.mxu0 0.0
    %303 = vmatpush1.msra.mxu0 %v285
    %304 = vmatprep.subr.mxu0 0.0
    %305 = vmatpush1.msra.mxu0 %v286
    %306 = vmatprep.subr.mxu0 0.0
    %307 = vmatpush1.msra.mxu0 0.0
    %308 = vmatprep.subr.mxu0 0.0
    %309 = vmatpush1.msra.mxu0 0.0
    %310 = vmatprep.subr.mxu0 0.0
    %311 = vmatpush1.msra.mxu0 0.0
    %312 = vmatprep.subr.mxu0 0.0
    %313 = vmatpush1.msra.mxu0 0.0
    %314 = vmatprep.subr.mxu0 0.0
    %315 = vmatpush1.msra.mxu0 0.0
    %316 = vmatprep.subr.mxu0 0.0
    %317 = vmatpush1.msra.mxu0 0.0
    %318 = vmatprep.subr.mxu0 0.0
    %319 = vmatpush1.msra.mxu0 0.0
    %320 = vmatprep.subr.mxu0 0.0
    %321 = vmatpush1.msra.mxu0 0.0
    %322 = vmatprep.subr.mxu0 0.0
    %323 = vmatpush1.msra.mxu0 0.0
    %324 = vmatprep.subr.mxu0 0.0
    %325 = vmatpush1.msra.mxu0 0.0
    %326 = vmatprep.subr.mxu0 0.0
    %327 = vmatpush1.msra.mxu0 0.0
    %328 = vmatprep.subr.mxu0 0.0
    %329 = vmatpush1.msra.mxu0 0.0
    %330 = vmatprep.subr.mxu0 0.0
    %331 = vmatpush1.msra.mxu0 0.0
    %332 = vmatprep.subr.mxu0 0.0
    %333 = vmatpush1.msra.mxu0 0.0
    %334 = vmatprep.subr.mxu0 0.0
    %335 = vmatpush1.msra.mxu0 0.0
    %336 = vmatprep.subr.mxu0 0.0
    %337 = vmatpush1.msra.mxu0 0.0
    %338 = vmatprep.subr.mxu0 0.0
    %339 = vmatpush1.msra.mxu0 0.0
    %340 = vmatprep.subr.mxu0 0.0
    %341 = vmatpush1.msra.mxu0 0.0
    %342 = vmatprep.subr.mxu0 0.0
    %343 = vmatpush1.msra.mxu0 0.0
    %344 = vmatprep.subr.mxu0 0.0
    %345 = vmatpush1.msra.mxu0 0.0
    %346 = vmatprep.subr.mxu0 0.0
    %347 = vmatpush1.msra.mxu0 0.0
    %348 = vmatprep.subr.mxu0 0.0
    %349 = vmatpush1.msra.mxu0 0.0
    %350 = vmatprep.subr.mxu0 0.0
    %351 = vmatpush1.msra.mxu0 0.0
    %352 = vmatprep.subr.mxu0 0.0
    %353 = vmatpush1.msra.mxu0 0.0
    %354 = vmatprep.subr.mxu0 0.0
    %355 = vmatpush1.msra.mxu0 0.0
    %356 = vmatprep.subr.mxu0 0.0
    %357 = vmatpush1.msra.mxu0 0.0
    %358 = vmatprep.subr.mxu0 0.0
    %359 = vmatpush1.msra.mxu0 0.0
    %360 = vmatprep.subr.mxu0 0.0
    %361 = vmatpush1.msra.mxu0 0.0
    %362 = vmatprep.mubr.f32.mxu0 0.0
    %363 = vmatmul.mubr.f32.gmra.mrb[0].mxu0 %v296
    %v364 = vpop.f32.mrb[0].mxu0
    %v365 = vadd.f32 %v292, %v364
    %v366 = vpop.f32.mrb[0].mxu0
    %367 = vdwg.mxu0
    %vm368 = vcmask 64512
    %v370 = vsel %vm368, %v43, 0
    %v373 = vsel %vm368, %v44, 0
    %v376 = vsel %vm368, %v45, 0
    %v379 = vsel %vm368, %v46, 0
    %v382 = vsel %vm368, %v47, 0
    %v385 = vsel %vm368, %v48, 0
    %v388 = vsel %vm368, %v49, 0
    %390 = vmatprep.subr.mxu0 0.0
    %391 = vmatpush1.msra.mxu0 %v365
    %392 = vmatprep.subr.mxu0 0.0
    %393 = vmatpush1.msra.mxu0 0.0
    %394 = vmatprep.subr.mxu0 0.0
    %395 = vmatpush1.msra.mxu0 0.0
    %396 = vmatprep.subr.mxu0 0.0
    %397 = vmatpush1.msra.mxu0 0.0
    %398 = vmatprep.subr.mxu0 0.0
    %399 = vmatpush1.msra.mxu0 0.0
    %400 = vmatprep.subr.mxu0 0.0
    %401 = vmatpush1.msra.mxu0 0.0
    %402 = vmatprep.subr.mxu0 0.0
    %403 = vmatpush1.msra.mxu0 0.0
    %404 = vmatprep.subr.mxu0 0.0
    %405 = vmatpush1.msra.mxu0 0.0
    %406 = vmatprep.subr.mxu0 0.0
    %407 = vmatpush1.msra.mxu0 0.0
    %408 = vmatprep.subr.mxu0 0.0
    %409 = vmatpush1.msra.mxu0 0.0
    %410 = vmatprep.subr.mxu0 0.0
    %411 = vmatpush1.msra.mxu0 0.0
    %412 = vmatprep.subr.mxu0 0.0
    %413 = vmatpush1.msra.mxu0 0.0
    %414 = vmatprep.subr.mxu0 0.0
    %415 = vmatpush1.msra.mxu0 0.0
    %416 = vmatprep.subr.mxu0 0.0
    %417 = vmatpush1.msra.mxu0 0.0
    %418 = vmatprep.subr.mxu0 0.0
    %419 = vmatpush1.msra.mxu0 0.0
    %420 = vmatprep.subr.mxu0 0.0
    %421 = vmatpush1.msra.mxu0 0.0
    %422 = vmatprep.subr.mxu0 0.0
    %423 = vmatpush1.msra.mxu0 0.0
    %424 = vmatprep.subr.mxu0 0.0
    %425 = vmatpush1.msra.mxu0 0.0
    %426 = vmatprep.subr.mxu0 0.0
    %427 = vmatpush1.msra.mxu0 0.0
    %428 = vmatprep.subr.mxu0 0.0
    %429 = vmatpush1.msra.mxu0 0.0
    %430 = vmatprep.subr.mxu0 0.0
    %431 = vmatpush1.msra.mxu0 0.0
    %432 = vmatprep.subr.mxu0 0.0
    %433 = vmatpush1.msra.mxu0 0.0
    %434 = vmatprep.subr.mxu0 0.0
    %435 = vmatpush1.msra.mxu0 0.0
    %436 = vmatprep.subr.mxu0 0.0
    %437 = vmatpush1.msra.mxu0 0.0
    %438 = vmatprep.subr.mxu0 0.0
    %439 = vmatpush1.msra.mxu0 0.0
    %440 = vmatprep.subr.mxu0 0.0
    %441 = vmatpush1.msra.mxu0 0.0
    %442 = vmatprep.subr.mxu0 0.0
    %443 = vmatpush1.msra.mxu0 0.0
    %444 = vmatprep.subr.mxu0 0.0
    %445 = vmatpush1.msra.mxu0 0.0
    %446 = vmatprep.subr.mxu0 0.0
    %447 = vmatpush1.msra.mxu0 0.0
    %448 = vmatprep.subr.mxu0 0.0
    %449 = vmatpush1.msra.mxu0 0.0
    %450 = vmatprep.subr.mxu0 0.0
    %451 = vmatpush1.msra.mxu0 0.0
    %452 = vmatprep.subr.mxu0 0.0
    %453 = vmatpush1.msra.mxu0 0.0
    %454 = vmatprep.mubr.f32.mxu0 0.0
    %455 = vmatmul.mubr.f32.gmra.mrb[0].mxu0 %v370
    %v456 = vpop.f32.mrb[0].mxu0
    %v457 = vadd.f32 0.0, %v456
    %v458 = vpop.f32.mrb[0].mxu0
    %459 = vmatprep.mubr.f32.mxu0 0.0
    %460 = vmatmul.mubr.f32.gmra.mrb[0].mxu0 %v373
    %v461 = vpop.f32.mrb[0].mxu0
    %v462 = vadd.f32 0.0, %v461
    %v463 = vpop.f32.mrb[0].mxu0
    %464 = vmatprep.mubr.f32.mxu0 0.0
    %465 = vmatmul.mubr.f32.gmra.mrb[0].mxu0 %v376
    %v466 = vpop.f32.mrb[0].mxu0
    %v467 = vadd.f32 0.0, %v466
    %v468 = vpop.f32.mrb[0].mxu0
    %469 = vmatprep.mubr.f32.mxu0 0.0
    %470 = vmatmul.mubr.f32.gmra.mrb[0].mxu0 %v379
    %v471 = vpop.f32.mrb[0].mxu0
    %v472 = vadd.f32 0.0, %v471
    %v473 = vpop.f32.mrb[0].mxu0
    %474 = vmatprep.mubr.f32.mxu0 0.0
    %475 = vmatmul.mubr.f32.gmra.mrb[0].mxu0 %v382
    %v476 = vpop.f32.mrb[0].mxu0
    %v477 = vadd.f32 0.0, %v476
    %v478 = vpop.f32.mrb[0].mxu0
    %479 = vmatprep.mubr.f32.mxu0 0.0
    %480 = vmatmul.mubr.f32.gmra.mrb[0].mxu0 %v385
    %v481 = vpop.f32.mrb[0].mxu0
    %v482 = vadd.f32 0.0, %v481
    %v483 = vpop.f32.mrb[0].mxu0
    %484 = vmatprep.mubr.f32.mxu0 0.0
    %485 = vmatmul.mubr.f32.gmra.mrb[0].mxu0 %v388
    %v486 = vpop.f32.mrb[0].mxu0
    %v487 = vadd.f32 0.0, %v486
    %v488 = vpop.f32.mrb[0].mxu0
    %489 = vdwg.mxu0
    %v490 = vmul.f32 %v457, %v145
    %v491 = vmul.f32 %v462, %v150
    %v492 = vmul.f32 %v467, %v155
    %v493 = vmul.f32 %v472, %v160
    %v494 = vmul.f32 %v477, %v165
    %v495 = vmul.f32 %v482, %v170
    %v496 = vmul.f32 %v487, %v175
    %vm497 = vcmask 457728
    %v499 = vsel %vm497, %v50, 0
    %501 = vmatprep.subr.mxu0 0.0
    %502 = vmatpush1.msra.mxu0 %v490
    %503 = vmatprep.subr.mxu0 0.0
    %504 = vmatpush1.msra.mxu0 %v491
    %505 = vmatprep.subr.mxu0 0.0
    %506 = vmatpush1.msra.mxu0 %v492
    %507 = vmatprep.subr.mxu0 0.0
    %508 = vmatpush1.msra.mxu0 %v493
    %509 = vmatprep.subr.mxu0 0.0
    %510 = vmatpush1.msra.mxu0 %v494
    %511 = vmatprep.subr.mxu0 0.0
    %512 = vmatpush1.msra.mxu0 %v495
    %513 = vmatprep.subr.mxu0 0.0
    %514 = vmatpush1.msra.mxu0 %v496
    %515 = vmatprep.subr.mxu0 0.0
    %516 = vmatpush1.msra.mxu0 0.0
    %517 = vmatprep.subr.mxu0 0.0
    %518 = vmatpush1.msra.mxu0 0.0
    %519 = vmatprep.subr.mxu0 0.0
    %520 = vmatpush1.msra.mxu0 0.0
    %521 = vmatprep.subr.mxu0 0.0
    %522 = vmatpush1.msra.mxu0 0.0
    %523 = vmatprep.subr.mxu0 0.0
    %524 = vmatpush1.msra.mxu0 0.0
    %525 = vmatprep.subr.mxu0 0.0
    %526 = vmatpush1.msra.mxu0 0.0
    %527 = vmatprep.subr.mxu0 0.0
    %528 = vmatpush1.msra.mxu0 0.0
    %529 = vmatprep.subr.mxu0 0.0
    %530 = vmatpush1.msra.mxu0 0.0
    %531 = vmatprep.subr.mxu0 0.0
    %532 = vmatpush1.msra.mxu0 0.0
    %533 = vmatprep.subr.mxu0 0.0
    %534 = vmatpush1.msra.mxu0 0.0
    %535 = vmatprep.subr.mxu0 0.0
    %536 = vmatpush1.msra.mxu0 0.0
    %537 = vmatprep.subr.mxu0 0.0
    %538 = vmatpush1.msra.mxu0 0.0
    %539 = vmatprep.subr.mxu0 0.0
    %540 = vmatpush1.msra.mxu0 0.0
    %541 = vmatprep.subr.mxu0 0.0
    %542 = vmatpush1.msra.mxu0 0.0
    %543 = vmatprep.subr.mxu0 0.0
    %544 = vmatpush1.msra.mxu0 0.0
    %545 = vmatprep.subr.mxu0 0.0
    %546 = vmatpush1.msra.mxu0 0.0
    %547 = vmatprep.subr.mxu0 0.0
    %548 = vmatpush1.msra.mxu0 0.0
    %549 = vmatprep.subr.mxu0 0.0
    %550 = vmatpush1.msra.mxu0 0.0
    %551 = vmatprep.subr.mxu0 0.0
    %552 = vmatpush1.msra.mxu0 0.0
    %553 = vmatprep.subr.mxu0 0.0
    %554 = vmatpush1.msra.mxu0 0.0
    %555 = vmatprep.subr.mxu0 0.0
    %556 = vmatpush1.msra.mxu0 0.0
    %557 = vmatprep.subr.mxu0 0.0
    %558 = vmatpush1.msra.mxu0 0.0
    %559 = vmatprep.subr.mxu0 0.0
    %560 = vmatpush1.msra.mxu0 0.0
    %561 = vmatprep.subr.mxu0 0.0
    %562 = vmatpush1.msra.mxu0 0.0
    %563 = vmatprep.subr.mxu0 0.0
    %564 = vmatpush1.msra.mxu0 0.0
    %565 = vmatprep.mubr.f32.mxu0 0.0
    %566 = vmatmul.mubr.f32.gmra.mrb[0].mxu0 %v499
    %v567 = vpop.f32.mrb[0].mxu0
    %v568 = vadd.f32 0.0, %v567
    %v569 = vpop.f32.mrb[0].mxu0
    %570 = vdwg.mxu0
    %v571 = vld [vmem:[%s8] sm:$0xff]
    %v572 = vld [vmem:[%s8 + $0x8] sm:$0xff]
    %v573 = vld [vmem:[%s8 + $0x10] sm:$0xff]
    %v574 = vld [vmem:[%s8 + $0x18] sm:$0xff]
    %v575 = vld [vmem:[%s8 + $0x20] sm:$0xff]
    %v576 = vld [vmem:[%s8 + $0x28] sm:$0xff]
    %v577 = vld [vmem:[%s8 + $0x30] sm:$0xff]
    %v578 = vld [vmem:[%s8 + $0x38] sm:$0xff]
    %v579 = vld [vmem:[%s9] sm:$0x1]
    %v581 = vlaneseq
    %v582 = vshrl.u32 %v581, 7
    %v583 = vsub.s32 0, %v582
    %v584 = vrot.slane %v579, %v583
    %vm586 = vcmask 523264
    %v588 = vsel %vm586, %v568, 0
    %590 = vmatprep.subr.mxu0 0.0
    %591 = vmatpush1.msra.mxu0 %v571
    %592 = vmatprep.subr.mxu0 0.0
    %593 = vmatpush1.msra.mxu0 %v572
    %594 = vmatprep.subr.mxu0 0.0
    %595 = vmatpush1.msra.mxu0 %v573
    %596 = vmatprep.subr.mxu0 0.0
    %597 = vmatpush1.msra.mxu0 %v574
    %598 = vmatprep.subr.mxu0 0.0
    %599 = vmatpush1.msra.mxu0 %v575
    %600 = vmatprep.subr.mxu0 0.0
    %601 = vmatpush1.msra.mxu0 %v576
    %602 = vmatprep.subr.mxu0 0.0
    %603 = vmatpush1.msra.mxu0 %v577
    %604 = vmatprep.subr.mxu0 0.0
    %605 = vmatpush1.msra.mxu0 %v578
    %606 = vmatprep.subr.mxu0 0.0
    %607 = vmatpush1.msra.mxu0 0.0
    %608 = vmatprep.subr.mxu0 0.0
    %609 = vmatpush1.msra.mxu0 0.0
    %610 = vmatprep.subr.mxu0 0.0
    %611 = vmatpush1.msra.mxu0 0.0
    %612 = vmatprep.subr.mxu0 0.0
    %613 = vmatpush1.msra.mxu0 0.0
    %614 = vmatprep.subr.mxu0 0.0
    %615 = vmatpush1.msra.mxu0 0.0
    %616 = vmatprep.subr.mxu0 0.0
    %617 = vmatpush1.msra.mxu0 0.0
    %618 = vmatprep.subr.mxu0 0.0
    %619 = vmatpush1.msra.mxu0 0.0
    %620 = vmatprep.subr.mxu0 0.0
    %621 = vmatpush1.msra.mxu0 0.0
    %622 = vmatprep.subr.mxu0 0.0
    %623 = vmatpush1.msra.mxu0 0.0
    %624 = vmatprep.subr.mxu0 0.0
    %625 = vmatpush1.msra.mxu0 0.0
    %626 = vmatprep.subr.mxu0 0.0
    %627 = vmatpush1.msra.mxu0 0.0
    %628 = vmatprep.subr.mxu0 0.0
    %629 = vmatpush1.msra.mxu0 0.0
    %630 = vmatprep.subr.mxu0 0.0
    %631 = vmatpush1.msra.mxu0 0.0
    %632 = vmatprep.subr.mxu0 0.0
    %633 = vmatpush1.msra.mxu0 0.0
    %634 = vmatprep.subr.mxu0 0.0
    %635 = vmatpush1.msra.mxu0 0.0
    %636 = vmatprep.subr.mxu0 0.0
    %637 = vmatpush1.msra.mxu0 0.0
    %638 = vmatprep.subr.mxu0 0.0
    %639 = vmatpush1.msra.mxu0 0.0
    %640 = vmatprep.subr.mxu0 0.0
    %641 = vmatpush1.msra.mxu0 0.0
    %642 = vmatprep.subr.mxu0 0.0
    %643 = vmatpush1.msra.mxu0 0.0
    %644 = vmatprep.subr.mxu0 0.0
    %645 = vmatpush1.msra.mxu0 0.0
    %646 = vmatprep.subr.mxu0 0.0
    %647 = vmatpush1.msra.mxu0 0.0
    %648 = vmatprep.subr.mxu0 0.0
    %649 = vmatpush1.msra.mxu0 0.0
    %650 = vmatprep.subr.mxu0 0.0
    %651 = vmatpush1.msra.mxu0 0.0
    %652 = vmatprep.subr.mxu0 0.0
    %653 = vmatpush1.msra.mxu0 0.0
    %654 = vmatprep.mubr.f32.mxu0 0.0
    %655 = vmatmul.mubr.f32.gmra.mrb[0].mxu0 %v588
    %v656 = vpop.f32.mrb[0].mxu0
    %v657 = vadd.f32 %v584, %v656
    %v658 = vpop.f32.mrb[0].mxu0
    %659 = vdwg.mxu0
    %660 = vmatprep.subr.mxu0 0.0
    %661 = vmatpush1.msra.mxu0 %v657
    %662 = vmatprep.subr.mxu0 0.0
    %663 = vmatpush1.msra.mxu0 0.0
    %664 = vmatprep.subr.mxu0 0.0
    %665 = vmatpush1.msra.mxu0 0.0
    %666 = vmatprep.subr.mxu0 0.0
    %667 = vmatpush1.msra.mxu0 0.0
    %668 = vmatprep.subr.mxu0 0.0
    %669 = vmatpush1.msra.mxu0 0.0
    %670 = vmatprep.subr.mxu0 0.0
    %671 = vmatpush1.msra.mxu0 0.0
    %672 = vmatprep.subr.mxu0 0.0
    %673 = vmatpush1.msra.mxu0 0.0
    %674 = vmatprep.subr.mxu0 0.0
    %675 = vmatpush1.msra.mxu0 0.0
    %676 = vmatprep.subr.mxu0 0.0
    %677 = vmatpush1.msra.mxu0 0.0
    %678 = vmatprep.subr.mxu0 0.0
    %679 = vmatpush1.msra.mxu0 0.0
    %680 = vmatprep.subr.mxu0 0.0
    %681 = vmatpush1.msra.mxu0 0.0
    %682 = vmatprep.subr.mxu0 0.0
    %683 = vmatpush1.msra.mxu0 0.0
    %684 = vmatprep.subr.mxu0 0.0
    %685 = vmatpush1.msra.mxu0 0.0
    %686 = vmatprep.subr.mxu0 0.0
    %687 = vmatpush1.msra.mxu0 0.0
    %688 = vmatprep.subr.mxu0 0.0
    %689 = vmatpush1.msra.mxu0 0.0
    %690 = vmatprep.subr.mxu0 0.0
    %691 = vmatpush1.msra.mxu0 0.0
    %692 = vmatprep.subr.mxu0 0.0
    %693 = vmatpush1.msra.mxu0 0.0
    %694 = vmatprep.subr.mxu0 0.0
    %695 = vmatpush1.msra.mxu0 0.0
    %696 = vmatprep.subr.mxu0 0.0
    %697 = vmatpush1.msra.mxu0 0.0
    %698 = vmatprep.subr.mxu0 0.0
    %699 = vmatpush1.msra.mxu0 0.0
    %700 = vmatprep.subr.mxu0 0.0
    %701 = vmatpush1.msra.mxu0 0.0
    %702 = vmatprep.subr.mxu0 0.0
    %703 = vmatpush1.msra.mxu0 0.0
    %704 = vmatprep.subr.mxu0 0.0
    %705 = vmatpush1.msra.mxu0 0.0
    %706 = vmatprep.subr.mxu0 0.0
    %707 = vmatpush1.msra.mxu0 0.0
    %708 = vmatprep.subr.mxu0 0.0
    %709 = vmatpush1.msra.mxu0 0.0
    %710 = vmatprep.subr.mxu0 0.0
    %711 = vmatpush1.msra.mxu0 0.0
    %712 = vmatprep.subr.mxu0 0.0
    %713 = vmatpush1.msra.mxu0 0.0
    %714 = vmatprep.subr.mxu0 0.0
    %715 = vmatpush1.msra.mxu0 0.0
    %716 = vmatprep.subr.mxu0 0.0
    %717 = vmatpush1.msra.mxu0 0.0
    %718 = vmatprep.subr.mxu0 0.0
    %719 = vmatpush1.msra.mxu0 0.0
    %720 = vmatprep.subr.mxu0 0.0
    %721 = vmatpush1.msra.mxu0 0.0
    %722 = vmatprep.subr.mxu0 0.0
    %723 = vmatpush1.msra.mxu0 0.0
    %724 = vmatprep.mubr.f32.mxu0 0.0
    %725 = vmatmul.mubr.f32.gmra.mrb[0].mxu0 %v370
    %v726 = vpop.f32.mrb[0].mxu0
    %v727 = vadd.f32 0.0, %v726
    %v728 = vpop.f32.mrb[0].mxu0
    %729 = vmatprep.mubr.f32.mxu0 0.0
    %730 = vmatmul.mubr.f32.gmra.mrb[0].mxu0 %v373
    %v731 = vpop.f32.mrb[0].mxu0
    %v732 = vadd.f32 0.0, %v731
    %v733 = vpop.f32.mrb[0].mxu0
    %734 = vmatprep.mubr.f32.mxu0 0.0
    %735 = vmatmul.mubr.f32.gmra.mrb[0].mxu0 %v376
    %v736 = vpop.f32.mrb[0].mxu0
    %v737 = vadd.f32 0.0, %v736
    %v738 = vpop.f32.mrb[0].mxu0
    %739 = vmatprep.mubr.f32.mxu0 0.0
    %740 = vmatmul.mubr.f32.gmra.mrb[0].mxu0 %v379
    %v741 = vpop.f32.mrb[0].mxu0
    %v742 = vadd.f32 0.0, %v741
    %v743 = vpop.f32.mrb[0].mxu0
    %744 = vmatprep.mubr.f32.mxu0 0.0
    %745 = vmatmul.mubr.f32.gmra.mrb[0].mxu0 %v382
    %v746 = vpop.f32.mrb[0].mxu0
    %v747 = vadd.f32 0.0, %v746
    %v748 = vpop.f32.mrb[0].mxu0
    %749 = vmatprep.mubr.f32.mxu0 0.0
    %750 = vmatmul.mubr.f32.gmra.mrb[0].mxu0 %v385
    %v751 = vpop.f32.mrb[0].mxu0
    %v752 = vadd.f32 0.0, %v751
    %v753 = vpop.f32.mrb[0].mxu0
    %754 = vmatprep.mubr.f32.mxu0 0.0
    %755 = vmatmul.mubr.f32.gmra.mrb[0].mxu0 %v388
    %v756 = vpop.f32.mrb[0].mxu0
    %v757 = vadd.f32 0.0, %v756
    %v758 = vpop.f32.mrb[0].mxu0
    %759 = vdwg.mxu0
    %v760 = vmul.f32 %v727, %v249
    %v761 = vmul.f32 %v732, %v254
    %v762 = vmul.f32 %v737, %v259
    %v763 = vmul.f32 %v742, %v264
    %v764 = vmul.f32 %v747, %v269
    %v765 = vmul.f32 %v752, %v274
    %v766 = vmul.f32 %v757, %v279
    %767 = vmatprep.subr.mxu0 0.0
    %768 = vmatpush1.msra.mxu0 %v760
    %769 = vmatprep.subr.mxu0 0.0
    %770 = vmatpush1.msra.mxu0 %v761
    %771 = vmatprep.subr.mxu0 0.0
    %772 = vmatpush1.msra.mxu0 %v762
    %773 = vmatprep.subr.mxu0 0.0
    %774 = vmatpush1.msra.mxu0 %v763
    %775 = vmatprep.subr.mxu0 0.0
    %776 = vmatpush1.msra.mxu0 %v764
    %777 = vmatprep.subr.mxu0 0.0
    %778 = vmatpush1.msra.mxu0 %v765
    %779 = vmatprep.subr.mxu0 0.0
    %780 = vmatpush1.msra.mxu0 %v766
    %781 = vmatprep.subr.mxu0 0.0
    %782 = vmatpush1.msra.mxu0 0.0
    %783 = vmatprep.subr.mxu0 0.0
    %784 = vmatpush1.msra.mxu0 0.0
    %785 = vmatprep.subr.mxu0 0.0
    %786 = vmatpush1.msra.mxu0 0.0
    %787 = vmatprep.subr.mxu0 0.0
    %788 = vmatpush1.msra.mxu0 0.0
    %789 = vmatprep.subr.mxu0 0.0
    %790 = vmatpush1.msra.mxu0 0.0
    %791 = vmatprep.subr.mxu0 0.0
    %792 = vmatpush1.msra.mxu0 0.0
    %793 = vmatprep.subr.mxu0 0.0
    %794 = vmatpush1.msra.mxu0 0.0
    %795 = vmatprep.subr.mxu0 0.0
    %796 = vmatpush1.msra.mxu0 0.0
    %797 = vmatprep.subr.mxu0 0.0
    %798 = vmatpush1.msra.mxu0 0.0
    %799 = vmatprep.subr.mxu0 0.0
    %800 = vmatpush1.msra.mxu0 0.0
    %801 = vmatprep.subr.mxu0 0.0
    %802 = vmatpush1.msra.mxu0 0.0
    %803 = vmatprep.subr.mxu0 0.0
    %804 = vmatpush1.msra.mxu0 0.0
    %805 = vmatprep.subr.mxu0 0.0
    %806 = vmatpush1.msra.mxu0 0.0
    %807 = vmatprep.subr.mxu0 0.0
    %808 = vmatpush1.msra.mxu0 0.0
    %809 = vmatprep.subr.mxu0 0.0
    %810 = vmatpush1.msra.mxu0 0.0
    %811 = vmatprep.subr.mxu0 0.0
    %812 = vmatpush1.msra.mxu0 0.0
    %813 = vmatprep.subr.mxu0 0.0
    %814 = vmatpush1.msra.mxu0 0.0
    %815 = vmatprep.subr.mxu0 0.0
    %816 = vmatpush1.msra.mxu0 0.0
    %817 = vmatprep.subr.mxu0 0.0
    %818 = vmatpush1.msra.mxu0 0.0
    %819 = vmatprep.subr.mxu0 0.0
    %820 = vmatpush1.msra.mxu0 0.0
    %821 = vmatprep.subr.mxu0 0.0
    %822 = vmatpush1.msra.mxu0 0.0
    %823 = vmatprep.subr.mxu0 0.0
    %824 = vmatpush1.msra.mxu0 0.0
    %825 = vmatprep.subr.mxu0 0.0
    %826 = vmatpush1.msra.mxu0 0.0
    %827 = vmatprep.subr.mxu0 0.0
    %828 = vmatpush1.msra.mxu0 0.0
    %829 = vmatprep.subr.mxu0 0.0
    %830 = vmatpush1.msra.mxu0 0.0
    %831 = vmatprep.mubr.f32.mxu0 0.0
    %832 = vmatmul.mubr.f32.gmra.mrb[0].mxu0 %v499
    %v833 = vpop.f32.mrb[0].mxu0
    %v834 = vadd.f32 0.0, %v833
    %v835 = vpop.f32.mrb[0].mxu0
    %836 = vdwg.mxu0
    %v837 = vlaneseq
    %v838 = vshrl.u32 %v837, 7
    %vm839 = vcmp.ge.s32.totalorder %v838, 2
    %vm840 = vcmp.eq.s32.totalorder %v838, 0
    %v841 = vsel %vm840, 1, 0
    %vm842 = vcmp.eq.s32.totalorder %v841, 1
    %v843 = vsel %vm842, %v834, 0.0
    %v844 = vsel %vm294, %v843, 0.0
    %v845 = vrot.slane %v844, 4
    %v846 = vadd.f32 %v844, %v845
    %v847 = vrot.slane %v846, 2
    %v848 = vadd.f32 %v846, %v847
    %v849 = vrot.slane %v848, 1
    %v850 = vadd.f32 %v848, %v849
    %vm851 = vcmp.eq.s32.totalorder %v838, 1
    %v852 = vsel %vm851, 1, 0
    %vm853 = vcmp.eq.s32.totalorder %v852, 1
    %v854 = vsel %vm853, %v834, 0.0
    %v855 = vsel %vm294, %v854, 0.0
    %v856 = vrot.slane %v855, 4
    %v857 = vadd.f32 %v855, %v856
    %v858 = vrot.slane %v857, 2
    %v859 = vadd.f32 %v857, %v858
    %v860 = vrot.slane %v859, 1
    %v861 = vadd.f32 %v859, %v860
    %v862 = vsel %vm839, 1, 0
    %vm863 = vcmp.eq.s32.totalorder %v862, 1
    %v864 = vsel %vm863, %v834, -inf
    %v865 = vsel %vm294, %v864, -inf
    %v866 = vrot.slane %v865, 4
    %v867 = vmax.f32 %v865, %v866
    %v868 = vrot.slane %v867, 2
    %v869 = vmax.f32 %v867, %v868
    %v870 = vrot.slane %v869, 1
    %v871 = vmax.f32 %v869, %v870
    %v872 = vsel %vm863, %v834, inf
    %v873 = vsel %vm294, %v872, inf
    %v874 = vrot.slane %v873, 4
    %v875 = vmin.f32 %v873, %v874
    %v876 = vrot.slane %v875, 2
    %v877 = vmin.f32 %v875, %v876
    %v878 = vrot.slane %v877, 1
    %v879 = vmin.f32 %v877, %v878
    %v880 = vsel %vm863, %v834, 0.0
    %v881 = vsel %vm294, %v880, 0.0
    %v882 = vrot.slane %v881, 4
    %v883 = vadd.f32 %v881, %v882
    %v884 = vrot.slane %v883, 2
    %v885 = vadd.f32 %v883, %v884
    %v886 = vrot.slane %v885, 1
    %v887 = vadd.f32 %v885, %v886
    %v888 = vrcp.pop 6.0
    %v889 = vmul.f32 %v887, %v888
    %vm890 = vcmask 1040384
    %v891 = vsel %vm890, %v850, %v861
    %v892 = vsel %vm74, %v891, %v871
    %vm893 = vcmask 1042432
    %v894 = vsel %vm893, %v892, %v879
    %vm895 = vcmask 1043456
    %v896 = vsel %vm895, %v894, %v889
    %vm897 = vcmask 258048
    %898 = vst.msk [vmem:[#allocation2] sm:$0x1f] %vm897, %v896
    // Predicated region
    $region42: #{tpu_custom_call.1} parent=1 // pred_check
      _
    $region43: #{tpu_custom_call.1} parent=1 // pred_check_branch
      %900 = sbr.rel (0) target = $region45
    $region44: #{tpu_custom_call.1} parent=1 // pred_region
      %s902 = ssub.s32 128, 128
      %903 = vsyncadd [#allocation3], %s902
      %s905 = sshll.u32 [#allocation2], 4
      %s906 = int_to_ptr.vmem [resolvable:$true] %s905
      %908 = dma.vmem_to_hbm [thread:$0]  %s906, 128, %s10, [#allocation3]
    $region45: #{tpu_custom_call.1} parent=1 // pred_fallthru
      _
    // Predicated region
    $region46: #{tpu_custom_call.1} parent=1 // pred_check
      _
    $region47: #{tpu_custom_call.1} parent=1 // pred_check_branch
      %910 = sbr.rel (0) target = $region49
    $region48: #{tpu_custom_call.1} parent=1 // pred_region
      %911 = dma.done [#allocation3], 128
    $region49: #{tpu_custom_call.1} parent=1 // pred_fallthru
      _
    %912 = vsyncpa [#allocation3], 1

</llo_original>
